<compile_context>
chip_gen: v5e
topology: v5e:2x2
jax: 0.10.0
libtpu: 0.0.40
codegen_flags: <defaults>
</compile_context>

<pallas_src>
import functools
import math

import jax
import jax.numpy as jnp
from jax.experimental import pallas as pl
from jax.experimental.pallas import tpu as pltpu


# ---------------------------------------------------------------------------
# Small helpers.
# ---------------------------------------------------------------------------
def _round_up(x, m):
    return ((x + m - 1) // m) * m


def _choose_seq_tiling(s):
    """Returns (padded_seq_len, q/k tile). Pads to a multiple of 128 when S>256."""
    if s <= 256:
        return s, s                      # single tile covering the whole sequence
    sp = _round_up(s, 128)
    return sp, (256 if sp % 256 == 0 else 128)


def _pick_row_tile(rows):
    for t in (256, 128):
        if rows % t == 0:
            return t
    return rows                          # only hit for small B*S


def _pick_n_tile(hp):
    """Tile for the stacked 2*Hp output axis; keeps each weight block <= ~8 MiB."""
    two_hp = 2 * hp
    for t in (2048, 1024, 512):
        if two_hp % t == 0 and hp * t * 2 <= 8 * 1024 * 1024:
            return t
    return 256                           # always divides 2*hp (hp % 128 == 0)


def _vmem_limit_bytes(entries):
    """True per-step footprint (explicit buffer counts) + 25%, clamped to [16, 48] MiB."""
    total = 0
    for shape, dtype, bufs in entries:
        total += bufs * math.prod(shape) * jnp.dtype(dtype).itemsize
    need = int(total * 1.25)
    return max(16 * 1024 * 1024, min(need, 48 * 1024 * 1024))


# ---------------------------------------------------------------------------
# Stage 1: fused, pre-scaled [Q | K] projection on flattened rows.
# ---------------------------------------------------------------------------
def _qk_proj_kernel(x_ref, w_ref, b_ref, o_ref):
    # x_ref: (rt, Hp) bf16, w_ref: (Hp, tn) bf16, b_ref: (1, tn) f32.
    acc = jnp.dot(x_ref[...], w_ref[...], preferred_element_type=jnp.float32)
    o_ref[...] = (acc + b_ref[...]).astype(o_ref.dtype)


# ---------------------------------------------------------------------------
# Stage 2: tiled masked logits with triangular block specialization.
# ---------------------------------------------------------------------------
def _logits_kernel(q_ref, k_ref, *rest, tq, tk, has_mask):
    if has_mask:
        mq_ref, mk_ref, o_ref = rest
    else:
        (o_ref,) = rest

    qi = pl.program_id(1)
    kj = pl.program_id(2)
    below = (kj + 1) * tk <= qi * tq          # every col < every row
    above = kj * tk >= (qi + 1) * tq          # every col > every row

    @pl.when(below)
    def _():
        # Pure fill: no matmul, no K read (its DMA is also aliased away by the
        # clamped index_map / full-K residency in the wrapper).
        o_ref[0] = jnp.full((tq, tk), -1000000.0, dtype=o_ref.dtype)

    @pl.when(jnp.logical_not(below))
    def _():
        q = q_ref[0]                                           # (tq, Hp) bf16, pre-scaled
        if k_ref.shape[1] == tk:                               # tiled (or single-block) K
            k = k_ref[0]
        else:                                                  # full-K resident: slice block
            start = pl.multiple_of(kj * tk, tk)
            k = k_ref[0, pl.ds(start, tk), :]                  # (tk, Hp) bf16

        # Contract last dims directly (no K transpose / XLU relayout).
        logits = jax.lax.dot_general(
            q, k, dimension_numbers=(((1,), (1,)), ((), ())),
            preferred_element_type=jnp.float32)                # (tq, tk) f32

        if has_mask:
            pair = mq_ref[0][:, None] * mk_ref[0][None, :]     # (tq, tk)

        @pl.when(above)
        def _():
            # Strictly above the diagonal: triu is all-ones -> skip iota/compare.
            if has_mask:
                # Keep logits*m - 1e6*(1-m) (NOT (logits+1e6)*m - 1e6): adding
                # 1e6 before the multiply quantizes kept logits by ~0.03 (f32
                # ulp at 1e6) and would break the exact m==1 path.
                o_ref[0] = (logits * pair
                            - 1000000.0 * (1.0 - pair)).astype(o_ref.dtype)
            else:
                o_ref[0] = logits.astype(o_ref.dtype)

        @pl.when(jnp.logical_not(above))
        def _():
            rows = qi * tq + jax.lax.broadcasted_iota(jnp.int32, (tq, tk), 0)
            cols = kj * tk + jax.lax.broadcasted_iota(jnp.int32, (tq, tk), 1)
            tri = cols >= rows
            if has_mask:
                m = pair * tri.astype(jnp.float32)
                o_ref[0] = (logits * m
                            - 1000000.0 * (1.0 - m)).astype(o_ref.dtype)
            else:
                o_ref[0] = jnp.where(tri, logits, -1000000.0).astype(o_ref.dtype)


# ---------------------------------------------------------------------------
# Parameter prep (do once, not per forward call).
# ---------------------------------------------------------------------------
def prepare_task_layer_params(wq, bq, wk, bk, compute_dtype=jnp.bfloat16):
    """wq, wk: (H, H) PyTorch-Linear weights (out, in); bq, bk: (H,).

    Returns a stacked (Hp, 2*Hp) bf16 weight (Hp = H rounded up to 128) with the
    1/sqrt(H) logit scale folded into the query half, and a (1, 2*Hp) f32 bias.
    Zero padding keeps the padded hidden dims inert in both projections."""
    h = wq.shape[0]
    hp = _round_up(h, 128)
    scale = 1.0 / math.sqrt(h)           # torch divides by sqrt(hidden_size)

    def pad_wt(w):                        # (out,in) -> transposed+padded (Hp, Hp)
        return jnp.pad(w.T.astype(jnp.float32), ((0, hp - h), (0, hp - h)))

    w_stacked = jnp.concatenate([pad_wt(wq) * scale, pad_wt(wk)], axis=1)
    bq_p = jnp.pad(bq.astype(jnp.float32), (0, hp - h)) * scale
    bk_p = jnp.pad(bk.astype(jnp.float32), (0, hp - h))
    b_stacked = jnp.concatenate([bq_p, bk_p]).reshape(1, 2 * hp)
    return w_stacked.astype(compute_dtype), b_stacked


# ---------------------------------------------------------------------------
# Forward.
# ---------------------------------------------------------------------------
def task_layer_forward(hidden_states, w_stacked, b_stacked, attention_mask=None,
                       *, compute_dtype=jnp.bfloat16,
                       k_resident_bytes=24 * 1024 * 1024):
    """hidden_states: (B, S, H) f32; params from prepare_task_layer_params.
    attention_mask: optional (B, S) float mask. Returns (B, S*S) masked logits."""
    bsz, slen, hsz = hidden_states.shape
    hp = w_stacked.shape[0]
    assert w_stacked.shape == (hp, 2 * hp) and b_stacked.shape == (1, 2 * hp)
    assert hp % 128 == 0 and hp >= hsz

    sp, tq = _choose_seq_tiling(slen)

    # ---- pad H -> Hp (lane aligned) and S -> Sp (tile aligned); zeros are inert.
    x = hidden_states.astype(compute_dtype)
    if sp > slen or hp > hsz:
        x = jnp.pad(x, ((0, 0), (0, sp - slen), (0, hp - hsz)))

    # ---- Stage 1: stacked [Q | K] projection on flattened rows. ----
    rows = bsz * sp
    rt = _pick_row_tile(rows)
    tn = _pick_n_tile(hp)
    x2d = x.reshape(rows, hp)

    qk = pl.pallas_call(
        _qk_proj_kernel,
        out_shape=jax.ShapeDtypeStruct((rows, 2 * hp), compute_dtype),
        grid_spec=pltpu.PrefetchScalarGridSpec(
            num_scalar_prefetch=0,
            grid=(2 * hp // tn, rows // rt),      # N outer -> weight fetched once per N tile
            in_specs=[
                pl.BlockSpec((rt, hp), lambda n, r: (r, 0)),     # x rows
                pl.BlockSpec((hp, tn), lambda n, r: (0, n)),     # stacked W tile
                pl.BlockSpec((1, tn), lambda n, r: (0, n)),      # stacked bias tile
            ],
            out_specs=pl.BlockSpec((rt, tn), lambda n, r: (r, n))),
        compiler_params=pltpu.CompilerParams(
            dimension_semantics=("parallel", "parallel"),
            vmem_limit_bytes=_vmem_limit_bytes([
                ((rt, hp), compute_dtype, 2),
                ((hp, tn), compute_dtype, 2),
                ((1, tn), jnp.float32, 2),
                ((rt, tn), compute_dtype, 2),
                ((rt, tn), jnp.float32, 2),       # f32 accumulation temporaries
            ])),
    )(x2d, w_stacked, b_stacked)
    qk = qk.reshape(bsz, sp, 2 * hp)              # free reshape; [:, :, :hp]=Q, [:, :, hp:]=K

    # ---- Stage 2: tiled masked logits. ----
    has_mask = attention_mask is not None
    k_db_bytes = 2 * sp * hp * jnp.dtype(compute_dtype).itemsize   # double-buffered K half
    k_resident = k_db_bytes <= k_resident_bytes

    if k_resident:
        tk = tq
        # K index depends only on b -> DMA'd once per batch, resident across (i, j).
        k_spec = pl.BlockSpec((1, sp, hp), lambda b, i, j: (b, 0, 1))
    else:
        if sp % 512 == 0:
            tk = 512
        elif sp % 256 == 0:
            tk = 256
        else:
            tk = tq
        # Clamp below-diagonal steps to the first needed block: skipped steps
        # alias a block that is fetched anyway, so no wasted K DMA.
        k_spec = pl.BlockSpec(
            (1, tk, hp), lambda b, i, j: (b, jnp.maximum(j, (i * tq) // tk), 1))

    q_spec = pl.BlockSpec((1, tq, hp), lambda b, i, j: (b, i, 0))
    in_specs = [q_spec, k_spec]
    operands = [qk, qk]
    if has_mask:
        mask_p = attention_mask.astype(jnp.float32)
        if sp > slen:
            mask_p = jnp.pad(mask_p, ((0, 0), (0, sp - slen)))
        in_specs += [pl.BlockSpec((1, tq), lambda b, i, j: (b, i)),
                     pl.BlockSpec((1, tk), lambda b, i, j: (b, j))]
        operands += [mask_p, mask_p]

    k_rows = sp if k_resident else tk
    logits = pl.pallas_call(
        functools.partial(_logits_kernel, tq=tq, tk=tk, has_mask=has_mask),
        out_shape=jax.ShapeDtypeStruct((bsz, sp, sp), jnp.float32),
        grid_spec=pltpu.PrefetchScalarGridSpec(
            num_scalar_prefetch=0,
            grid=(bsz, sp // tq, sp // tk),
            in_specs=in_specs,
            out_specs=pl.BlockSpec((1, tq, tk), lambda b, i, j: (b, i, j))),
        compiler_params=pltpu.CompilerParams(
            dimension_semantics=("parallel", "parallel", "parallel"),
            vmem_limit_bytes=_vmem_limit_bytes([
                ((tq, hp), compute_dtype, 2),
                ((k_rows, hp), compute_dtype, 2),
                ((tq, tk), jnp.float32, 2),       # output blocks
                ((tq, tk), jnp.float32, 4),       # f32 logits / mask temporaries
                ((1, tq), jnp.float32, 2),
                ((1, tk), jnp.float32, 2),
            ])),
    )(*operands)

    if sp > slen:
        logits = logits[:, :slen, :slen]          # drop padded rows/cols
    return logits.reshape(bsz, slen * slen)       # matches logits.view(bsz, -1)


# ---------------------------------------------------------------------------
# Plain-JAX reference (mirrors TaskLayer.forward) and tests.
# ---------------------------------------------------------------------------
def _reference(hidden_states, wq, bq, wk, bk, attention_mask=None):
    bsz, slen, hsz = hidden_states.shape
    hi = jax.lax.Precision.HIGHEST
    q = jnp.einsum("bsh,oh->bso", hidden_states, wq, precision=hi) + bq
    k = jnp.einsum("bsh,oh->bso", hidden_states, wk, precision=hi) + bk
    logits = jnp.einsum("bqh,bkh->bqk", q, k, precision=hi) / math.sqrt(hsz)
    if attention_mask is None:
        m = jnp.ones((bsz, slen, slen), jnp.float32)
    else:
        m = attention_mask[:, :, None] * attention_mask[:, None, :]
    m = jnp.triu(m)
    logits = logits * m - 1000000.0 * (1.0 - m)
    return logits.reshape(bsz, -1)


def _run_case(case_key, bsz, slen, hsz, use_mask, k_resident_bytes=24 * 1024 * 1024):
    k_x, k_wq, k_bq, k_wk, k_bk, k_m = jax.random.split(case_key, 6)
    x = jax.random.normal(k_x, (bsz, slen, hsz), jnp.float32)

    bound = 1.0 / math.sqrt(hsz)          # PyTorch Linear default init range
    wq = jax.random.uniform(k_wq, (hsz, hsz), jnp.float32, -bound, bound)
    bq = jax.random.uniform(k_bq, (hsz,), jnp.float32, -bound, bound)
    wk = jax.random.uniform(k_wk, (hsz, hsz), jnp.float32, -bound, bound)
    bk = jax.random.uniform(k_bk, (hsz,), jnp.float32, -bound, bound)

    mask = None
    if use_mask:
        mask = (jax.random.uniform(k_m, (bsz, slen)) > 0.3).astype(jnp.float32)

    w_s, b_s = prepare_task_layer_params(wq, bq, wk, bk)
    out = task_layer_forward(x, w_s, b_s, mask, k_resident_bytes=k_resident_bytes)
    out = jax.block_until_ready(out)

    ref = _reference(x, wq, bq, wk, bk, mask)
    assert out.shape == (bsz, slen * slen), out.shape
    # bf16 MXU inputs (f32 accumulation) vs f32 reference -> bf16-level tolerance.
    assert jnp.allclose(out, ref, atol=5e-2, rtol=5e-2), \
        float(jnp.max(jnp.abs(out - ref)))


if __name__ == "__main__":
    root = jax.random.PRNGKey(0)
    k0, k1, k2, k3 = jax.random.split(root, 4)

    # Small shapes matching the module's toy usage (single-tile path).
    _run_case(k0, bsz=2, slen=8, hsz=32, use_mask=False)
    _run_case(k1, bsz=2, slen=8, hsz=32, use_mask=True)

    # Larger case: exercises S/H padding, 3x3 tile grid (below/above/diagonal
    # block branches) and the resident-K path.
    _run_case(k2, bsz=1, slen=320, hsz=96, use_mask=True)

    # Same shape with residency disabled: exercises the tiled-K fallback with
    # the clamped (no-wasted-DMA) index map and the no-mask kernel variant.
    _run_case(k3, bsz=1, slen=320, hsz=96, use_mask=False, k_resident_bytes=0)

    print("KERNEL_OK")
</pallas_src>

<mosaic_0001>
module attributes {stable_mosaic.version = 11 : i64} {
  func.func @_qk_proj_kernel(%arg0: i32, %arg1: i32, %arg2: memref<16x128xbf16, #tpu.memory_space<vmem>>, %arg3: memref<128x256xbf16, #tpu.memory_space<vmem>>, %arg4: memref<1x256xf32, #tpu.memory_space<vmem>>, %arg5: memref<16x256xbf16, #tpu.memory_space<vmem>>) attributes {dimension_semantics = [#tpu.dimension_semantics<parallel>, #tpu.dimension_semantics<parallel>], iteration_bounds = array<i64: 1, 1>, scalar_prefetch = 0 : i64, scratch_operands = 0 : i64, tpu.core_type = #tpu.core_type<tc>, window_params = [{transform_indices = @transform_0, window_bounds = array<i64: 16, 128>}, {transform_indices = @transform_1, window_bounds = array<i64: 128, 256>}, {transform_indices = @transform_2, window_bounds = array<i64: 1, 256>}, {transform_indices = @transform_3, window_bounds = array<i64: 16, 256>}]} {
    %c0 = arith.constant 0 : index
    %c0_0 = arith.constant 0 : index
    %0 = vector.load %arg2[%c0, %c0_0] : memref<16x128xbf16, #tpu.memory_space<vmem>>, vector<16x128xbf16>
    %c0_1 = arith.constant 0 : index
    %c0_2 = arith.constant 0 : index
    %1 = vector.load %arg3[%c0_1, %c0_2] : memref<128x256xbf16, #tpu.memory_space<vmem>>, vector<128x256xbf16>
    %cst = arith.constant dense<0.000000e+00> : vector<16x256xf32>
    %2 = tpu.matmul %0, %1, %cst {dimension_numbers = #tpu.dot_dimension_numbers<[1], [0], [0], [1], [0, 0, 1, 1], [], []>} : vector<16x128xbf16>, vector<128x256xbf16>, vector<16x256xf32> -> vector<16x256xf32>
    %c0_3 = arith.constant 0 : index
    %c0_4 = arith.constant 0 : index
    %3 = vector.load %arg4[%c0_3, %c0_4] : memref<1x256xf32, #tpu.memory_space<vmem>>, vector<1x256xf32>
    %4 = vector.broadcast %3 : vector<1x256xf32> to vector<16x256xf32>
    %5 = arith.addf %2, %4 : vector<16x256xf32>
    %6 = arith.truncf %5 : vector<16x256xf32> to vector<16x256xbf16>
    %c0_5 = arith.constant 0 : index
    %c0_6 = arith.constant 0 : index
    %7 = vector.load %arg5[%c0_5, %c0_6] : memref<16x256xbf16, #tpu.memory_space<vmem>>, vector<16x256xbf16>
    tpu.vector_store %arg5[%c0_5, %c0_6], %6 {strides = array<i32>} : memref<16x256xbf16, #tpu.memory_space<vmem>>, vector<16x256xbf16>,
    return
  }
  func.func @transform_0(%arg0: i32, %arg1: i32) -> (i32, i32) {
    %c0_i32 = arith.constant 0 : i32
    %c0_i32_0 = arith.constant 0 : i32
    return %arg1, %c0_i32 : i32, i32
  }
  func.func @transform_1(%arg0: i32, %arg1: i32) -> (i32, i32) {
    %c0_i32 = arith.constant 0 : i32
    %c0_i32_0 = arith.constant 0 : i32
    return %c0_i32, %arg0 : i32, i32
  }
  func.func @transform_2(%arg0: i32, %arg1: i32) -> (i32, i32) {
    %c0_i32 = arith.constant 0 : i32
    %c0_i32_0 = arith.constant 0 : i32
    return %c0_i32, %arg0 : i32, i32
  }
  func.func @transform_3(%arg0: i32, %arg1: i32) -> (i32, i32) {
    %c0_i32 = arith.constant 0 : i32
    return %arg1, %arg0 : i32, i32
  }
}

</mosaic_0001>

<llo_original>
// kernel: tpu_custom_call.1
$region0: #{tpu_custom_call.1}
  #allocation0 [shape = 'u32[]', space=smem, size = 0x4, offset = 0x4, fixed_abs, tag = 'smem constant byte address 0x4 - core index']
  #allocation1 [shape = 'u32[72,128]{1,0:T(1,128)}', space=vmem, size = 0x9000, scoped, tag = 'internal scratch']
  %s0 = inlined_call_operand.hbm [shape: bf16[16,128], index: 0, kind: input, shape index: {}]
  %s1 = inlined_call_operand.hbm [shape: bf16[128,256], index: 1, kind: input, shape index: {}]
  %s2 = inlined_call_operand.hbm [shape: f32[1,256], index: 2, kind: input, shape index: {}]
  %s3 = inlined_call_operand.hbm [shape: bf16[16,256], index: 3, kind: output, shape index: {}]
  %s4 = sld [smem:[#allocation0]]
  $region34: #{tpu_custom_call.1} parent=0
    _
  %s6 = ssub.s32 1, %s4
  %s7 = scalar_select 0, %s6, %s4
  $region1: #{tpu_custom_call.1} parent=0
    #allocation2 [shape = 'u8[4096]{0}', space=vmem, size = 0x1000, scoped, tag = 'input window, operand 0, single buffered']
    #allocation3 [shape = 's32[1]{0}', space=sflag, size = 0x4, scoped, tag = 'scoped memory for tpu_custom_call.1']
    #allocation4 [shape = 's32[1]{0}', space=sflag, size = 0x4, scoped, tag = 'scoped memory for tpu_custom_call.1']
    #allocation5 [shape = 'u8[65536]{0}', space=vmem, size = 0x10000, scoped, tag = 'input window, operand 1, single buffered']
    #allocation6 [shape = 's32[1]{0}', space=sflag, size = 0x4, scoped, tag = 'scoped memory for tpu_custom_call.1']
    #allocation7 [shape = 'u8[1024]{0}', space=vmem, size = 0x400, scoped, tag = 'input window, operand 2, single buffered']
    #allocation8 [shape = 'u8[8192]{0}', space=vmem, size = 0x2000, scoped, tag = 'output window, operand 0, single buffered']
    %8 = vsyncpa [#allocation3], 0
    %9 = vsyncpa [#allocation6], 0
    %10 = vsyncpa [#allocation4], 0
    // Predicated region
    $region2: #{tpu_custom_call.1} parent=1 // pred_check
      _
    $region3: #{tpu_custom_call.1} parent=1 // pred_check_branch
      %12 = sbr.rel (0) target = $region5
    $region4: #{tpu_custom_call.1} parent=1 // pred_region
      %14 = vsyncadd [#allocation3], 0
      %s15 = sshll.u32 %s0, 4
      %s16 = int_to_ptr.hbm [resolvable:$true] %s15
      %s17 = sshll.u32 [#allocation2], 4
      %s18 = int_to_ptr.vmem [resolvable:$true] %s17
      %23 = dma.hbm_to_vmem [thread:$0]  %s16, 128, %s18, [#allocation3], 64, 64, 4
    $region5: #{tpu_custom_call.1} parent=1 // pred_fallthru
      _
    // Predicated region
    $region6: #{tpu_custom_call.1} parent=1 // pred_check
      _
    $region7: #{tpu_custom_call.1} parent=1 // pred_check_branch
      %25 = sbr.rel (0) target = $region9
    $region8: #{tpu_custom_call.1} parent=1 // pred_region
      %27 = vsyncadd [#allocation6], 0
      %s28 = sshll.u32 %s1, 4
      %s29 = int_to_ptr.hbm [resolvable:$true] %s28
      %s30 = sshll.u32 [#allocation5], 4
      %s31 = int_to_ptr.vmem [resolvable:$true] %s30
      %36 = dma.hbm_to_vmem [thread:$0]  %s29, 2048, %s31, [#allocation6], 128, 128, 8
    $region9: #{tpu_custom_call.1} parent=1 // pred_fallthru
      _
    // Predicated region
    $region10: #{tpu_custom_call.1} parent=1 // pred_check
      _
    $region11: #{tpu_custom_call.1} parent=1 // pred_check_branch
      %38 = sbr.rel (0) target = $region13
    $region12: #{tpu_custom_call.1} parent=1 // pred_region
      %40 = vsyncadd [#allocation6], 0
      %s42 = sshll.u32 %s2, 4
      %s43 = int_to_ptr.hbm [resolvable:$true] %s42
      %s44 = sshll.u32 [#allocation7], 4
      %s45 = int_to_ptr.vmem [resolvable:$true] %s44
      %47 = dma.hbm_to_vmem [thread:$0]  %s43, 32, %s45, [#allocation6]
    $region13: #{tpu_custom_call.1} parent=1 // pred_fallthru
      _
    // Predicated region
    $region14: #{tpu_custom_call.1} parent=1 // pred_check
      _
    $region15: #{tpu_custom_call.1} parent=1 // pred_check_branch
      %49 = sbr.rel (0) target = $region17
    $region16: #{tpu_custom_call.1} parent=1 // pred_region
      %51 = dma.done [#allocation3], 128
    $region17: #{tpu_custom_call.1} parent=1 // pred_fallthru
      _
    // Predicated region
    $region18: #{tpu_custom_call.1} parent=1 // pred_check
      _
    $region19: #{tpu_custom_call.1} parent=1 // pred_check_branch
      %53 = sbr.rel (0) target = $region21
    $region20: #{tpu_custom_call.1} parent=1 // pred_region
      %55 = dma.done [#allocation6], 2048
    $region21: #{tpu_custom_call.1} parent=1 // pred_fallthru
      _
    // Predicated region
    $region22: #{tpu_custom_call.1} parent=1 // pred_check
      _
    $region23: #{tpu_custom_call.1} parent=1 // pred_check_branch
      %57 = sbr.rel (0) target = $region25
    $region24: #{tpu_custom_call.1} parent=1 // pred_region
      %59 = dma.done [#allocation6], 32
    $region25: #{tpu_custom_call.1} parent=1 // pred_fallthru
      _
    %v60 = vld [vmem:[#allocation2] sm:$0xf]
    %v61 = vld [vmem:[#allocation2 + $0x4] sm:$0xf]
    %v62 = vld [vmem:[#allocation5] sm:$0xff]
    %v63 = vld [vmem:[#allocation5 + $0x8] sm:$0xff]
    %v64 = vld [vmem:[#allocation5 + $0x10] sm:$0xff]
    %v65 = vld [vmem:[#allocation5 + $0x18] sm:$0xff]
    %v66 = vld [vmem:[#allocation5 + $0x20] sm:$0xff]
    %v67 = vld [vmem:[#allocation5 + $0x28] sm:$0xff]
    %v68 = vld [vmem:[#allocation5 + $0x30] sm:$0xff]
    %v69 = vld [vmem:[#allocation5 + $0x38] sm:$0xff]
    %v70 = vld [vmem:[#allocation5 + $0x40] sm:$0xff]
    %v71 = vld [vmem:[#allocation5 + $0x48] sm:$0xff]
    %v72 = vld [vmem:[#allocation5 + $0x50] sm:$0xff]
    %v73 = vld [vmem:[#allocation5 + $0x58] sm:$0xff]
    %v74 = vld [vmem:[#allocation5 + $0x60] sm:$0xff]
    %v75 = vld [vmem:[#allocation5 + $0x68] sm:$0xff]
    %v76 = vld [vmem:[#allocation5 + $0x70] sm:$0xff]
    %v77 = vld [vmem:[#allocation5 + $0x78] sm:$0xff]
    %v78 = vld [vmem:[#allocation7] sm:$0x3]
    %v80 = vperm.slane %v78, 0
    %v81 = vperm.slane %v78, 1
    %v86 = vunpack.c.l.b16 %v60
    %v87 = vunpack.c.l.b16 %v61
    %v88 = vpack.c.b16 %v87, %v86
    %v106 = vunpack.c.l.b16 %v62
    %v107 = vunpack.c.h.b16 %v62
    %v108 = vunpack.c.l.b16 %v63
    %v109 = vunpack.c.h.b16 %v63
    %v110 = vunpack.c.l.b16 %v64
    %v111 = vunpack.c.h.b16 %v64
    %v112 = vunpack.c.l.b16 %v65
    %v113 = vunpack.c.h.b16 %v65
    %v114 = vunpack.c.l.b16 %v66
    %v115 = vunpack.c.h.b16 %v66
    %v116 = vunpack.c.l.b16 %v67
    %v117 = vunpack.c.h.b16 %v67
    %v118 = vunpack.c.l.b16 %v68
    %v119 = vunpack.c.h.b16 %v68
    %v120 = vunpack.c.l.b16 %v69
    %v121 = vunpack.c.h.b16 %v69
    %v122 = vunpack.c.l.b16 %v70
    %v123 = vunpack.c.h.b16 %v70
    %v124 = vunpack.c.l.b16 %v71
    %v125 = vunpack.c.h.b16 %v71
    %v126 = vunpack.c.l.b16 %v72
    %v127 = vunpack.c.h.b16 %v72
    %v128 = vunpack.c.l.b16 %v73
    %v129 = vunpack.c.h.b16 %v73
    %v130 = vunpack.c.l.b16 %v74
    %v131 = vunpack.c.h.b16 %v74
    %v132 = vunpack.c.l.b16 %v75
    %v133 = vunpack.c.h.b16 %v75
    %v134 = vunpack.c.l.b16 %v76
    %v135 = vunpack.c.h.b16 %v76
    %v136 = vunpack.c.l.b16 %v77
    %v137 = vunpack.c.h.b16 %v77
    %v138 = vpack.c.b16 %v108, %v106
    %v139 = vpack.c.b16 %v109, %v107
    %v140 = vpack.c.b16 %v112, %v110
    %v141 = vpack.c.b16 %v113, %v111
    %v142 = vpack.c.b16 %v116, %v114
    %v143 = vpack.c.b16 %v117, %v115
    %v144 = vpack.c.b16 %v120, %v118
    %v145 = vpack.c.b16 %v121, %v119
    %v146 = vpack.c.b16 %v124, %v122
    %v147 = vpack.c.b16 %v125, %v123
    %v148 = vpack.c.b16 %v128, %v126
    %v149 = vpack.c.b16 %v129, %v127
    %v150 = vpack.c.b16 %v132, %v130
    %v151 = vpack.c.b16 %v133, %v131
    %v152 = vpack.c.b16 %v136, %v134
    %v153 = vpack.c.b16 %v137, %v135
    %170 = vmatpush.bf16.msra.mxu0 %v152
    %171 = vmatpush.bf16.msra.mxu0 %v150
    %172 = vmatpush.bf16.msra.mxu0 %v148
    %173 = vmatpush.bf16.msra.mxu0 %v146
    %174 = vmatpush.bf16.msra.mxu0 %v144
    %175 = vmatpush.bf16.msra.mxu0 %v142
    %176 = vmatpush.bf16.msra.mxu0 %v140
    %177 = vmatpush.bf16.msra.mxu0 %v138
    %178 = vmatmul.bf16.gmra.mxu0 %v88
    %v179 = vpop.f32.mrf.mxu0
    %v180 = vadd.f32 %v80, %v179
    %v181 = vpop.f32.mrf.mxu0
    %v182 = vadd.f32 %v80, %v181
    %183 = vdwg.mxu0
    %184 = vmatpush.bf16.msra.mxu0 %v153
    %185 = vmatpush.bf16.msra.mxu0 %v151
    %186 = vmatpush.bf16.msra.mxu0 %v149
    %187 = vmatpush.bf16.msra.mxu0 %v147
    %188 = vmatpush.bf16.msra.mxu0 %v145
    %189 = vmatpush.bf16.msra.mxu0 %v143
    %190 = vmatpush.bf16.msra.mxu0 %v141
    %191 = vmatpush.bf16.msra.mxu0 %v139
    %192 = vmatmul.bf16.gmra.mxu0 %v88
    %v193 = vpop.f32.mrf.mxu0
    %v194 = vadd.f32 %v81, %v193
    %v195 = vpop.f32.mrf.mxu0
    %v196 = vadd.f32 %v81, %v195
    %197 = vdwg.mxu0
    %v198 = vpack.c.bf16 %v194, %v180
    %v199 = vpack.c.bf16 %v196, %v182
    %200 = vst [vmem:[#allocation8] sm:$0xff] %v198
    %201 = vst [vmem:[#allocation8 + $0x8] sm:$0xff] %v199
    // Predicated region
    $region26: #{tpu_custom_call.1} parent=1 // pred_check
      _
    $region27: #{tpu_custom_call.1} parent=1 // pred_check_branch
      %203 = sbr.rel (0) target = $region29
    $region28: #{tpu_custom_call.1} parent=1 // pred_region
      %205 = vsyncadd [#allocation4], 0
      %s206 = sshll.u32 [#allocation8], 4
      %s207 = int_to_ptr.vmem [resolvable:$true] %s206
      %s208 = sshll.u32 %s3, 4
      %s209 = int_to_ptr.hbm [resolvable:$true] %s208
      %214 = dma.vmem_to_hbm [thread:$0]  %s207, 256, %s209, [#allocation4], 128, 128, 8
    $region29: #{tpu_custom_call.1} parent=1 // pred_fallthru
      _
    // Predicated region
    $region30: #{tpu_custom_call.1} parent=1 // pred_check
      _
    $region31: #{tpu_custom_call.1} parent=1 // pred_check_branch
      %216 = sbr.rel (0) target = $region33
    $region32: #{tpu_custom_call.1} parent=1 // pred_region
      %218 = dma.done [#allocation4], 256
    $region33: #{tpu_custom_call.1} parent=1 // pred_fallthru
      _
    %219 = vsyncpa [#allocation3], 1
    %220 = vsyncpa [#allocation6], 1
    %221 = vsyncpa [#allocation4], 1

</llo_original>
